<compile_context>
chip_gen: v7x
topology: tpu7x:2x2x1
jax: 0.10.0
libtpu: 0.0.40
codegen_flags: <defaults>
</compile_context>

<pallas_src>
import functools

import jax
import jax.numpy as jnp
import numpy as np
from jax import lax
from jax.experimental import pallas as pl
from jax.experimental.pallas import tpu as pltpu


def _round_up(x, m):
    return ((x + m - 1) // m) * m


def _device_kind():
    try:
        devs = jax.devices()
        return devs[0].device_kind.lower() if devs else ""
    except Exception:  # pragma: no cover - defensive
        return ""


def _choose_tile_c(c, itemsize, target_bytes):
    """Full C (no redundant mask/ids work per channel sweep) unless even a
    128-row slab of full C blows the per-buffer byte budget; then the largest
    128-multiple divisor of C that fits."""
    if c % 128 != 0 or 128 * c * itemsize <= target_bytes:
        return c
    m = c // 128
    for k in range(m - 1, 0, -1):
        if m % k == 0 and 128 * (128 * k) * itemsize <= target_bytes:
            return 128 * k
    return 128


def _choose_tile_n(n, tile_c, itemsize, b_chunk, target_bytes):
    """Row tile: multiple of 128, capped by bytes only (no hard row cap), plus a
    cap keeping the (b_chunk, tile_n) one-hot mask temporaries VMEM-friendly."""
    if n <= 128:
        return n
    row_bytes = max(1, tile_c * itemsize)
    mask_row_bytes = max(1, _round_up(b_chunk, 8) * (itemsize + 4))
    t = min(target_bytes // row_bytes, (6 * 1024 * 1024) // mask_row_bytes)
    t = max(128, (t // 128) * 128)
    t = min(t, _round_up(n, 128))
    return n if t >= n else int(t)


def _pool_kernel(feat_ref, ids_ref, sum_ref, cnt_ref, *,
                 batch_size, b_chunk, tile_n, n_total,
                 blocks_per_split, may_have_oob, mm_precision):
    """grid = (row-splits [parallel], channel blocks [parallel], row tiles [reduction])."""
    ni = pl.program_id(2)                                   # reduction axis, innermost
    global_ni = pl.program_id(0) * blocks_per_split + ni    # global row-tile index

    @pl.when(ni == 0)
    def _init():
        sum_ref[...] = jnp.zeros_like(sum_ref)
        cnt_ref[...] = jnp.zeros_like(cnt_ref)

    feat = feat_ref[...]                  # (tile_n, tile_c), kept in input dtype
    ids = ids_ref[...]                    # (1, tile_n) int32, lane-dense

    def accumulate(feat_t, valid_row):
        # Chunk the batch dim so the one-hot mask stays small (bounded vreg/VMEM
        # pressure) and matches the MXU M dimension for large batch sizes.
        for b0 in range(0, batch_size, b_chunk):
            bsz = min(b_chunk, batch_size - b0)
            b_iota = lax.broadcasted_iota(jnp.int32, (bsz, tile_n), 0) + b0
            member = b_iota == ids                           # (bsz, tile_n) bool
            if valid_row is not None:
                member = jnp.logical_and(member, valid_row)
            mask = member.astype(feat_t.dtype)
            # MXU: per-batch feature sums, (bsz, tile_n) @ (tile_n, tile_c) -> f32.
            part_sum = lax.dot_general(
                mask, feat_t, (((1,), (0,)), ((), ())),
                preferred_element_type=jnp.float32, precision=mm_precision)
            # Per-batch point counts: lane-axis (XLU) reduce, no 2nd matmul.
            part_cnt = jnp.sum(member, axis=1, keepdims=True).astype(jnp.float32)
            if bsz == batch_size:
                sum_ref[...] += part_sum
                cnt_ref[...] += part_cnt
            else:
                sum_ref[pl.ds(b0, bsz), :] += part_sum
                cnt_ref[pl.ds(b0, bsz), :] += part_cnt

    if may_have_oob:
        # Pay the ragged-tail masking (two iotas + full-tile select) only on the
        # tiles that actually reach past row n_total, not on every grid step.
        tile_is_partial = (global_ni + 1) * tile_n > n_total

        @pl.when(jnp.logical_not(tile_is_partial))
        def _full_tile():
            accumulate(feat, None)

        @pl.when(tile_is_partial)
        def _partial_tile():
            row0 = global_ni * tile_n
            valid_row = (lax.broadcasted_iota(jnp.int32, (1, tile_n), 1) + row0) < n_total
            valid_col = (lax.broadcasted_iota(jnp.int32, (tile_n, 1), 0) + row0) < n_total
            # Zero OOB feature rows (NaN safety for 0 * garbage in the matmul).
            feat_m = jnp.where(valid_col, feat, jnp.zeros((), feat.dtype))
            accumulate(feat_m, valid_row)
    else:
        accumulate(feat, None)


def sparse_global_pool(features, batch_ids, batch_size, *, tile_n=None, tile_c=None):
    """Pallas equivalent of SparseGlobalPool(torch.mean).

    features:  (N, C) float array of per-point features.
    batch_ids: (N,)   int array, batch index of each point.
    returns:   (B, C) per-batch mean features (zeros for empty batches).
    """
    if batch_size == 0:
        # torch path: `sparse_tensor.features[:0]`
        return features[:0]

    n, c = features.shape
    if n == 0:
        # every batch is empty -> stack of zero rows
        return jnp.zeros((batch_size, c), features.dtype)

    itemsize = jnp.dtype(features.dtype).itemsize
    kind = _device_kind()
    is_v5e = ("v5 lite" in kind) or ("v5e" in kind)
    multi_tc = "v7" in kind                         # v7x: 2 TensorCores per chip

    # Per-generation byte target per pipeline buffer (v5e: 820 GB/s -> 4 MiB is
    # already <10% step overhead; v6e/v7x benefit from bigger tiles).
    target_bytes = (4 if is_v5e else 8) * 1024 * 1024
    b_chunk = min(batch_size, 128 if is_v5e else 256)

    if tile_c is None:
        tile_c = _choose_tile_c(c, itemsize, target_bytes)
    assert c % tile_c == 0 and (tile_c == c or tile_c % 128 == 0), "bad tile_c"

    if tile_n is None:
        tile_n = _choose_tile_n(n, tile_c, itemsize, b_chunk, target_bytes)
    else:
        tile_n = int(tile_n)
        if tile_n >= n:
            tile_n = n
        assert tile_n == n or tile_n % 128 == 0, "tile_n must be a multiple of 128 or >= N"

    num_c_blocks = c // tile_c
    n_blocks_total = pl.cdiv(n, tile_n)
    # v7x megacore: split rows 2-way so each TensorCore streams half the features
    # (works even when there is only one channel block). On 1-TC chips: split=1.
    num_splits = 2 if (multi_tc and n_blocks_total >= 2) else 1
    blocks_per_split = pl.cdiv(n_blocks_total, num_splits)
    # True iff some tile may contain row indices >= n (partial tail or phantom block).
    may_have_oob = (num_splits * blocks_per_split * tile_n) != n
    last_block = n_blocks_total - 1
    needs_clamp = (num_splits * blocks_per_split) > n_blocks_total  # phantom block exists

    if needs_clamp:
        def _row_block(si, ni):
            return jnp.minimum(si * blocks_per_split + ni, last_block)
    else:
        def _row_block(si, ni):
            return si * blocks_per_split + ni

    def feat_map(si, ci, ni):
        return (_row_block(si, ni), ci)

    def ids_map(si, ci, ni):
        return (0, _row_block(si, ni))

    def out_map(si, ci, ni):
        return (si, 0, ci)

    # Lane-dense id row (tiny copy: N int32); the (N, C) features are NOT copied.
    ids_row = batch_ids.astype(jnp.int32).reshape(1, n)

    mm_precision = lax.Precision.HIGHEST if features.dtype == jnp.float32 else None

    kernel = functools.partial(
        _pool_kernel, batch_size=batch_size, b_chunk=b_chunk, tile_n=tile_n,
        n_total=n, blocks_per_split=blocks_per_split,
        may_have_oob=may_have_oob, mm_precision=mm_precision)

    # Explicit VMEM budget: feature dbuf + ids dbuf (sublane-padded) + one-hot
    # mask temporaries + output blocks, with headroom. Clamped well under the
    # smallest physical VMEM (v7x: 64 MiB/TC).
    b_pad = _round_up(batch_size, 8)
    vmem_est = (2 * tile_n * tile_c * itemsize
                + 2 * 8 * _round_up(tile_n, 128) * 4
                + tile_n * _round_up(b_chunk, 8) * (itemsize + 4)
                + 2 * b_pad * tile_c * 4
                + 2 * b_pad * 128 * 4)
    vmem_limit = int(min(max(vmem_est * 3 // 2 + (2 << 20), 24 << 20), 56 << 20))

    sums, counts = pl.pallas_call(
        kernel,
        out_shape=(
            jax.ShapeDtypeStruct((num_splits, batch_size, c), jnp.float32),
            jax.ShapeDtypeStruct((num_splits, batch_size, 1), jnp.float32),
        ),
        grid_spec=pltpu.PrefetchScalarGridSpec(
            num_scalar_prefetch=0,
            grid=(num_splits, num_c_blocks, blocks_per_split),  # reduction axis last
            in_specs=[
                pl.BlockSpec((tile_n, tile_c), feat_map),
                pl.BlockSpec((1, tile_n), ids_map),
            ],
            out_specs=[
                pl.BlockSpec((None, batch_size, tile_c), out_map),  # per-split sums (f32)
                pl.BlockSpec((None, batch_size, 1), out_map),       # per-split counts (f32)
            ],
        ),
        compiler_params=pltpu.CompilerParams(
            dimension_semantics=("parallel", "parallel", "arbitrary"),
            vmem_limit_bytes=vmem_limit),
    )(features, ids_row)

    # Tiny (B, C) epilogue: combine per-split partials and divide by counts.
    total = sums.sum(axis=0)
    cnt = counts.sum(axis=0)
    out = jnp.where(cnt > 0, total / jnp.maximum(cnt, 1.0), 0.0)
    return out.astype(features.dtype)


if __name__ == "__main__":
    key = jax.random.PRNGKey(0)

    def reference(features, batch_ids, batch_size):
        f = np.asarray(features, dtype=np.float64)
        ids = np.asarray(batch_ids)
        out = np.zeros((batch_size, f.shape[1]), dtype=np.float64)
        for b in range(batch_size):
            rows = f[ids == b]
            if rows.shape[0]:
                out[b] = rows.mean(axis=0)
        return out

    k1, k2, k3, k4 = jax.random.split(key, 4)

    # Test 1: small shapes implied by the module; batch 2 intentionally empty -> zeros row.
    bsz1, n1, c1 = 3, 50, 32
    feat1 = jax.random.normal(k1, (n1, c1), dtype=jnp.float32)
    ids1 = jax.random.randint(k2, (n1,), 0, 2, dtype=jnp.int32)   # only {0, 1}
    out1 = jax.block_until_ready(sparse_global_pool(feat1, ids1, bsz1))
    assert out1.shape == (bsz1, c1)
    np.testing.assert_allclose(np.asarray(out1), reference(feat1, ids1, bsz1),
                               rtol=1e-5, atol=1e-5)

    # Test 2: forced small tiles -> multi-block reduction with a ragged last tile
    # (exercises the gated tail-masking path and, on v7x, the 2-way row split).
    bsz2, n2, c2 = 4, 300, 256
    feat2 = jax.random.normal(k3, (n2, c2), dtype=jnp.float32)
    ids2 = jax.random.randint(k4, (n2,), 0, bsz2, dtype=jnp.int32)
    out2 = jax.block_until_ready(
        sparse_global_pool(feat2, ids2, bsz2, tile_n=128, tile_c=128))
    assert out2.shape == (bsz2, c2)
    np.testing.assert_allclose(np.asarray(out2), reference(feat2, ids2, bsz2),
                               rtol=1e-5, atol=1e-5)

    print("KERNEL_OK")
</pallas_src>

<mosaic_0001>
module attributes {stable_mosaic.version = 11 : i64} {
  func.func @_pool_kernel(%arg0: i32, %arg1: i32, %arg2: i32, %arg3: memref<50x32xf32, #tpu.memory_space<vmem>>, %arg4: memref<1x50xi32, #tpu.memory_space<vmem>>, %arg5: memref<1x3x32xf32, #tpu.memory_space<vmem>>, %arg6: memref<1x3x1xf32, #tpu.memory_space<vmem>>) attributes {dimension_semantics = [#tpu.dimension_semantics<parallel>, #tpu.dimension_semantics<parallel>, #tpu.dimension_semantics<arbitrary>], iteration_bounds = array<i64: 1, 1, 1>, scalar_prefetch = 0 : i64, scratch_operands = 0 : i64, tpu.core_type = #tpu.core_type<tc>, window_params = [{transform_indices = @transform_0, window_bounds = array<i64: 50, 32>}, {transform_indices = @transform_1, window_bounds = array<i64: 1, 50>}, {transform_indices = @transform_2, window_bounds = array<i64: 1, 3, 32>}, {transform_indices = @transform_3, window_bounds = array<i64: 1, 3, 1>}]} {
    %c0_i32 = arith.constant 0 : i32
    %0 = arith.cmpi eq, %arg2, %c0_i32 : i32
    %1 = arith.extui %0 : i1 to i32
    %c0_i32_0 = arith.constant 0 : i32
    %2 = arith.cmpi ne, %1, %c0_i32_0 : i32
    scf.if %2 {
      %cst_18 = arith.constant 0.000000e+00 : f32
      %29 = vector.broadcast %cst_18 : f32 to vector<3x32xf32>
      %c0_19 = arith.constant 0 : index
      %c0_20 = arith.constant 0 : index
      %c0_21 = arith.constant 0 : index
      %30 = vector.load %arg5[%c0_19, %c0_20, %c0_21] : memref<1x3x32xf32, #tpu.memory_space<vmem>>, vector<1x3x32xf32>
      %31 = vector.shape_cast %30 : vector<1x3x32xf32> to vector<3x32xf32>
      %32 = vector.shape_cast %29 : vector<3x32xf32> to vector<1x3x32xf32>
      tpu.vector_store %arg5[%c0_19, %c0_20, %c0_21], %32 {strides = array<i32>} : memref<1x3x32xf32, #tpu.memory_space<vmem>>, vector<1x3x32xf32>,
      %cst_22 = arith.constant 0.000000e+00 : f32
      %33 = vector.broadcast %cst_22 : f32 to vector<3x1xf32>
      %c0_23 = arith.constant 0 : index
      %c0_24 = arith.constant 0 : index
      %c0_25 = arith.constant 0 : index
      %34 = vector.load %arg6[%c0_23, %c0_24, %c0_25] : memref<1x3x1xf32, #tpu.memory_space<vmem>>, vector<1x3x1xf32>
      %35 = vector.shape_cast %34 : vector<1x3x1xf32> to vector<3x1xf32>
      %36 = vector.shape_cast %33 : vector<3x1xf32> to vector<1x3x1xf32>
      tpu.vector_store %arg6[%c0_23, %c0_24, %c0_25], %36 {strides = array<i32>} : memref<1x3x1xf32, #tpu.memory_space<vmem>>, vector<1x3x1xf32>,
    } else {
    }
    %c0 = arith.constant 0 : index
    %c0_1 = arith.constant 0 : index
    %3 = vector.load %arg3[%c0, %c0_1] : memref<50x32xf32, #tpu.memory_space<vmem>>, vector<50x32xf32>
    %c0_2 = arith.constant 0 : index
    %c0_3 = arith.constant 0 : index
    %4 = vector.load %arg4[%c0_2, %c0_3] : memref<1x50xi32, #tpu.memory_space<vmem>>, vector<1x50xi32>
    %5 = tpu.iota {dimensions = array<i32: 0>} : vector<3x50xi32>
    %c0_i32_4 = arith.constant 0 : i32
    %6 = vector.broadcast %c0_i32_4 : i32 to vector<3x50xi32>
    %7 = arith.addi %5, %6 : vector<3x50xi32>
    %8 = vector.broadcast %4 : vector<1x50xi32> to vector<3x50xi32>
    %9 = arith.cmpi eq, %7, %8 : vector<3x50xi32>
    %10 = arith.extui %9 : vector<3x50xi1> to vector<3x50xi32>
    %11 = arith.sitofp %10 : vector<3x50xi32> to vector<3x50xf32>
    %cst = arith.constant dense<0.000000e+00> : vector<3x32xf32>
    %12 = tpu.matmul %11, %3, %cst {dimension_numbers = #tpu.dot_dimension_numbers<[1], [0], [0], [1], [0, 0, 1, 1], [], []>, precision = #tpu.contract_precision<fp32>} : vector<3x50xf32>, vector<50x32xf32>, vector<3x32xf32> -> vector<3x32xf32>
    %13 = arith.extui %9 : vector<3x50xi1> to vector<3x50xi32>
    %cst_5 = arith.constant dense<0> : vector<3xi32>
    %14 = vector.multi_reduction <add>, %13, %cst_5 [1] : vector<3x50xi32> to vector<3xi32>
    %15 = vector.shape_cast %14 : vector<3xi32> to vector<3x1xi32>
    %16 = arith.sitofp %15 : vector<3x1xi32> to vector<3x1xf32>
    %c0_6 = arith.constant 0 : index
    %c0_7 = arith.constant 0 : index
    %c0_8 = arith.constant 0 : index
    %17 = vector.load %arg5[%c0_6, %c0_7, %c0_8] : memref<1x3x32xf32, #tpu.memory_space<vmem>>, vector<1x3x32xf32>
    %18 = vector.shape_cast %17 : vector<1x3x32xf32> to vector<3x32xf32>
    %19 = arith.addf %18, %12 : vector<3x32xf32>
    %c0_9 = arith.constant 0 : index
    %c0_10 = arith.constant 0 : index
    %c0_11 = arith.constant 0 : index
    %20 = vector.load %arg5[%c0_9, %c0_10, %c0_11] : memref<1x3x32xf32, #tpu.memory_space<vmem>>, vector<1x3x32xf32>
    %21 = vector.shape_cast %20 : vector<1x3x32xf32> to vector<3x32xf32>
    %22 = vector.shape_cast %19 : vector<3x32xf32> to vector<1x3x32xf32>
    tpu.vector_store %arg5[%c0_9, %c0_10, %c0_11], %22 {strides = array<i32>} : memref<1x3x32xf32, #tpu.memory_space<vmem>>, vector<1x3x32xf32>,
    %c0_12 = arith.constant 0 : index
    %c0_13 = arith.constant 0 : index
    %c0_14 = arith.constant 0 : index
    %23 = vector.load %arg6[%c0_12, %c0_13, %c0_14] : memref<1x3x1xf32, #tpu.memory_space<vmem>>, vector<1x3x1xf32>
    %24 = vector.shape_cast %23 : vector<1x3x1xf32> to vector<3x1xf32>
    %25 = arith.addf %24, %16 : vector<3x1xf32>
    %c0_15 = arith.constant 0 : index
    %c0_16 = arith.constant 0 : index
    %c0_17 = arith.constant 0 : index
    %26 = vector.load %arg6[%c0_15, %c0_16, %c0_17] : memref<1x3x1xf32, #tpu.memory_space<vmem>>, vector<1x3x1xf32>
    %27 = vector.shape_cast %26 : vector<1x3x1xf32> to vector<3x1xf32>
    %28 = vector.shape_cast %25 : vector<3x1xf32> to vector<1x3x1xf32>
    tpu.vector_store %arg6[%c0_15, %c0_16, %c0_17], %28 {strides = array<i32>} : memref<1x3x1xf32, #tpu.memory_space<vmem>>, vector<1x3x1xf32>,
    return
  }
  func.func @transform_0(%arg0: i32, %arg1: i32, %arg2: i32) -> (i32, i32) {
    %c1_i32 = arith.constant 1 : i32
    %0 = arith.muli %arg0, %c1_i32 : i32
    %1 = arith.addi %0, %arg2 : i32
    %c0_i32 = arith.constant 0 : i32
    return %1, %arg1 : i32, i32
  }
  func.func @transform_1(%arg0: i32, %arg1: i32, %arg2: i32) -> (i32, i32) {
    %c1_i32 = arith.constant 1 : i32
    %0 = arith.muli %arg0, %c1_i32 : i32
    %1 = arith.addi %0, %arg2 : i32
    %c0_i32 = arith.constant 0 : i32
    %c0_i32_0 = arith.constant 0 : i32
    return %c0_i32, %1 : i32, i32
  }
  func.func @transform_2(%arg0: i32, %arg1: i32, %arg2: i32) -> (i32, i32, i32) {
    %c0_i32 = arith.constant 0 : i32
    %c0_i32_0 = arith.constant 0 : i32
    return %arg0, %c0_i32, %arg1 : i32, i32, i32
  }
  func.func @transform_3(%arg0: i32, %arg1: i32, %arg2: i32) -> (i32, i32, i32) {
    %c0_i32 = arith.constant 0 : i32
    %c0_i32_0 = arith.constant 0 : i32
    return %arg0, %c0_i32, %arg1 : i32, i32, i32
  }
}

</mosaic_0001>

<llo_original>
// kernel: tpu_custom_call.1
$region0: #{tpu_custom_call.1}
  #allocation0 [shape = 'u32[]', space=smem, size = 0x4, offset = 0x4, fixed_abs, tag = 'smem constant byte address 0x4 - core index']
  #allocation1 [shape = 'u32[144,128]{1,0:T(1,128)}', space=vmem, size = 0x12000, scoped, tag = 'internal scratch']
  %s0 = inlined_call_operand.vmem [shape: f32[50,32], index: 0, kind: input, shape index: {}]
  %s1 = inlined_call_operand.vmem [shape: s32[1,50], index: 1, kind: input, shape index: {}]
  %s2 = inlined_call_operand.vmem [shape: f32[1,3,32], index: 2, kind: output, shape index: {0}]
  %s3 = inlined_call_operand.vmem [shape: f32[1,3,1], index: 3, kind: output, shape index: {1}]
  %4 = xla_tuple %s2, %s3
  %s5 = sld [smem:[#allocation0]]
  $region30: #{tpu_custom_call.1} parent=0
    _
  %s7 = ssub.s32 1, %s5
  %s8 = scalar_select 0, %s7, %s5
  // Predicated region
  $region2: #{tpu_custom_call.1} parent=0 // pred_check
    _
  $region3: #{tpu_custom_call.1} parent=0 // pred_check_branch
    %10 = sbr.rel (0) target = $region5
  $region4: #{tpu_custom_call.1} parent=0 // pred_region
    %s11 = sadd.s32 0, 0
    %s12 = smul.u32 7, %s11
    %p13 = scmp.lt.s32.totalorder %s12, 6
    %s14 = scalar_select %p13, %s12, 6
    %s15 = smul.addr %s14, 8
    %s16 = scalar_lea.vmem %s0, %s15
    %s17 = sadd.s32 0, 0
    %s18 = smul.u32 7, %s17
  $region5: #{tpu_custom_call.1} parent=0 // pred_fallthru
    _
  // Predicated region
  $region6: #{tpu_custom_call.1} parent=0 // pred_check
    _
  $region7: #{tpu_custom_call.1} parent=0 // pred_check_branch
    %20 = sbr.rel (0) target = $region9
  $region8: #{tpu_custom_call.1} parent=0 // pred_region
    %s21 = sadd.s32 0, 0
    %p22 = scmp.lt.s32.totalorder %s21, 0
    %s23 = scalar_select %p22, %s21, 0
    %s24 = scalar_lea.vmem %s1, %s23
    %s25 = sadd.s32 0, 0
  $region9: #{tpu_custom_call.1} parent=0 // pred_fallthru
    _
  %s26 = sadd.s32 0, 0
  %s27 = smul.u32 7, %s26
  %p28 = scmp.lt.s32.totalorder %s27, 6
  %s29 = scalar_select %p28, %s27, 6
  %s30 = smul.addr %s29, 8
  %s31 = scalar_lea.vmem %s0, %s30
  %s32 = sadd.s32 0, 0
  %p33 = scmp.lt.s32.totalorder %s32, 0
  %s34 = scalar_select %p33, %s32, 0
  %s35 = scalar_lea.vmem %s1, %s34
  %s36 = sadd.s32 0, 0
  %s37 = smul.u32 7, %s36
  %p38 = scmp.lt.s32.totalorder %s37, 6
  %s39 = scalar_select %p38, %s37, 6
  %s40 = smul.addr %s39, 8
  %s41 = scalar_lea.vmem %s0, %s40
  %s42 = sadd.s32 0, 0
  %s43 = smul.u32 7, %s42
  %s44 = sadd.s32 0, 0
  %p45 = scmp.lt.s32.totalorder %s44, 0
  %s46 = scalar_select %p45, %s44, 0
  %s47 = scalar_lea.vmem %s1, %s46
  %s48 = sadd.s32 0, 0
  %p49 = scmp.eq.s32.totalorder 0, 0
  // Predicated region
  $region10: #{tpu_custom_call.1} parent=0 // pred_check
    %p50 = pneg %p49
  $region11: #{tpu_custom_call.1} parent=0 // pred_check_branch
    %52 = sbr.rel (%p50) target = $region13
  $region12: #{tpu_custom_call.1} parent=0 // pred_region
    %vm53 = vcmask 256000
    %54 = vst.msk [vmem:[%s2] sm:$0x7] %vm53, 0.0
    %vm55 = vcmask 2048
    %56 = vst.msk [vmem:[%s3] sm:$0x7] %vm55, 0.0
  $region13: #{tpu_custom_call.1} parent=0 // pred_fallthru
    _
  %v57 = vld [vmem:[%s41] sm:$0xff]
  %v58 = vld [vmem:[%s41 + $0x8] sm:$0xff]
  %v59 = vld [vmem:[%s41 + $0x10] sm:$0xff]
  %v60 = vld [vmem:[%s41 + $0x18] sm:$0xff]
  %v61 = vld [vmem:[%s41 + $0x20] sm:$0xff]
  %v62 = vld [vmem:[%s41 + $0x28] sm:$0xff]
  %v63 = vld [vmem:[%s41 + $0x30] sm:$0x3]
  %v64 = vld [vmem:[%s47] sm:$0x1]
  %v65 = vlaneseq
  %v66 = vshrl.u32 %v65, 7
  %v67 = vlaneseq
  %v68 = vshrl.u32 %v67, 7
  %v69 = vsub.s32 0, %v68
  %v70 = vrot.slane %v64, %v69
  %vm71 = vcmp.eq.s32.totalorder %v66, %v70
  %v72 = vsel %vm71, 1, 0
  %v73 = vcvt.s32.f32 %v72
  %vm74 = vcmask 408576
  %v76 = vsel %vm74, %v73, 0
  %vm78 = vcmask 1041408
  %v80 = vsel %vm78, %v63, 0
  %82 = vmatprep.subr.mxu0 0.0
  %v83 = vand.u32 %v57, 4294901760
  %84 = vmatpush1.msra.mxu0 %v83
  %85 = vmatprep.subr.mxu0 0.0
  %v86 = vand.u32 %v58, 4294901760
  %87 = vmatpush1.msra.mxu0 %v86
  %88 = vmatprep.subr.mxu0 0.0
  %v89 = vand.u32 %v59, 4294901760
  %90 = vmatpush1.msra.mxu0 %v89
  %91 = vmatprep.subr.mxu0 0.0
  %v92 = vand.u32 %v60, 4294901760
  %93 = vmatpush1.msra.mxu0 %v92
  %94 = vmatprep.subr.mxu0 0.0
  %v95 = vand.u32 %v61, 4294901760
  %96 = vmatpush1.msra.mxu0 %v95
  %97 = vmatprep.subr.mxu0 0.0
  %v98 = vand.u32 %v62, 4294901760
  %99 = vmatpush1.msra.mxu0 %v98
  %100 = vmatprep.subr.mxu0 0.0
  %v101 = vand.u32 %v80, 4294901760
  %102 = vmatpush1.msra.mxu0 %v101
  %103 = vmatprep.subr.mxu0 0.0
  %104 = vmatpush1.msra.mxu0 0.0
  %105 = vmatprep.subr.mxu0 0.0
  %106 = vmatpush1.msra.mxu0 0.0
  %107 = vmatprep.subr.mxu0 0.0
  %108 = vmatpush1.msra.mxu0 0.0
  %109 = vmatprep.subr.mxu0 0.0
  %110 = vmatpush1.msra.mxu0 0.0
  %111 = vmatprep.subr.mxu0 0.0
  %112 = vmatpush1.msra.mxu0 0.0
  %113 = vmatprep.subr.mxu0 0.0
  %114 = vmatpush1.msra.mxu0 0.0
  %115 = vmatprep.subr.mxu0 0.0
  %116 = vmatpush1.msra.mxu0 0.0
  %117 = vmatprep.subr.mxu0 0.0
  %118 = vmatpush1.msra.mxu0 0.0
  %119 = vmatprep.subr.mxu0 0.0
  %120 = vmatpush1.msra.mxu0 0.0
  %121 = vmatprep.subr.mxu0 0.0
  %122 = vmatpush1.msra.mxu0 0.0
  %123 = vmatprep.subr.mxu0 0.0
  %124 = vmatpush1.msra.mxu0 0.0
  %125 = vmatprep.subr.mxu0 0.0
  %126 = vmatpush1.msra.mxu0 0.0
  %127 = vmatprep.subr.mxu0 0.0
  %128 = vmatpush1.msra.mxu0 0.0
  %129 = vmatprep.subr.mxu0 0.0
  %130 = vmatpush1.msra.mxu0 0.0
  %131 = vmatprep.subr.mxu0 0.0
  %132 = vmatpush1.msra.mxu0 0.0
  %133 = vmatprep.subr.mxu0 0.0
  %134 = vmatpush1.msra.mxu0 0.0
  %135 = vmatprep.subr.mxu0 0.0
  %136 = vmatpush1.msra.mxu0 0.0
  %137 = vmatprep.subr.mxu0 0.0
  %138 = vmatpush1.msra.mxu0 0.0
  %139 = vmatprep.subr.mxu0 0.0
  %140 = vmatpush1.msra.mxu0 0.0
  %141 = vmatprep.subr.mxu0 0.0
  %142 = vmatpush1.msra.mxu0 0.0
  %143 = vmatprep.subr.mxu0 0.0
  %144 = vmatpush1.msra.mxu0 0.0
  %145 = vmatprep.subr.mxu0 0.0
  %146 = vmatpush1.msra.mxu0 0.0
  %147 = vmatprep.subr.mxu0 0.0
  %148 = vmatpush1.msra.mxu0 0.0
  %149 = vmatprep.subr.mxu0 0.0
  %150 = vmatpush1.msra.mxu0 0.0
  %151 = vmatprep.subr.mxu0 0.0
  %152 = vmatpush1.msra.mxu0 0.0
  %153 = vmatprep.mubr.f32.mxu0 0.0
  %v154 = vand.u32 %v76, 4294901760
  %v155 = vsub.f32 %v76, %v154
  %v156 = vand.u32 %v155, 4294901760
  %v157 = vsub.f32 %v155, %v156
  %v158 = vand.u32 %v157, 4294901760
  %159 = vmatmul.mubr.f32.gmra.mrb[0].mxu0 %v158
  %v160 = vpop.f32.mrb[0].mxu0
  %v161 = vadd.f32 0.0, %v160
  %v162 = vpop.f32.mrb[0].mxu0
  %163 = vdwg.mxu0
  %164 = vmatprep.subr.mxu0 0.0
  %v165 = vand.u32 %v57, 4294901760
  %v166 = vsub.f32 %v57, %v165
  %v167 = vand.u32 %v166, 4294901760
  %v168 = vsub.f32 %v166, %v167
  %v169 = vand.u32 %v168, 4294901760
  %170 = vmatpush1.msra.mxu0 %v169
  %171 = vmatprep.subr.mxu0 0.0
  %v172 = vand.u32 %v58, 4294901760
  %v173 = vsub.f32 %v58, %v172
  %v174 = vand.u32 %v173, 4294901760
  %v175 = vsub.f32 %v173, %v174
  %v176 = vand.u32 %v175, 4294901760
  %177 = vmatpush1.msra.mxu0 %v176
  %178 = vmatprep.subr.mxu0 0.0
  %v179 = vand.u32 %v59, 4294901760
  %v180 = vsub.f32 %v59, %v179
  %v181 = vand.u32 %v180, 4294901760
  %v182 = vsub.f32 %v180, %v181
  %v183 = vand.u32 %v182, 4294901760
  %184 = vmatpush1.msra.mxu0 %v183
  %185 = vmatprep.subr.mxu0 0.0
  %v186 = vand.u32 %v60, 4294901760
  %v187 = vsub.f32 %v60, %v186
  %v188 = vand.u32 %v187, 4294901760
  %v189 = vsub.f32 %v187, %v188
  %v190 = vand.u32 %v189, 4294901760
  %191 = vmatpush1.msra.mxu0 %v190
  %192 = vmatprep.subr.mxu0 0.0
  %v193 = vand.u32 %v61, 4294901760
  %v194 = vsub.f32 %v61, %v193
  %v195 = vand.u32 %v194, 4294901760
  %v196 = vsub.f32 %v194, %v195
  %v197 = vand.u32 %v196, 4294901760
  %198 = vmatpush1.msra.mxu0 %v197
  %199 = vmatprep.subr.mxu0 0.0
  %v200 = vand.u32 %v62, 4294901760
  %v201 = vsub.f32 %v62, %v200
  %v202 = vand.u32 %v201, 4294901760
  %v203 = vsub.f32 %v201, %v202
  %v204 = vand.u32 %v203, 4294901760
  %205 = vmatpush1.msra.mxu0 %v204
  %206 = vmatprep.subr.mxu0 0.0
  %v207 = vand.u32 %v80, 4294901760
  %v208 = vsub.f32 %v80, %v207
  %v209 = vand.u32 %v208, 4294901760
  %v210 = vsub.f32 %v208, %v209
  %v211 = vand.u32 %v210, 4294901760
  %212 = vmatpush1.msra.mxu0 %v211
  %213 = vmatprep.subr.mxu0 0.0
  %214 = vmatpush1.msra.mxu0 0.0
  %215 = vmatprep.subr.mxu0 0.0
  %216 = vmatpush1.msra.mxu0 0.0
  %217 = vmatprep.subr.mxu0 0.0
  %218 = vmatpush1.msra.mxu0 0.0
  %219 = vmatprep.subr.mxu0 0.0
  %220 = vmatpush1.msra.mxu0 0.0
  %221 = vmatprep.subr.mxu0 0.0
  %222 = vmatpush1.msra.mxu0 0.0
  %223 = vmatprep.subr.mxu0 0.0
  %224 = vmatpush1.msra.mxu0 0.0
  %225 = vmatprep.subr.mxu0 0.0
  %226 = vmatpush1.msra.mxu0 0.0
  %227 = vmatprep.subr.mxu0 0.0
  %228 = vmatpush1.msra.mxu0 0.0
  %229 = vmatprep.subr.mxu0 0.0
  %230 = vmatpush1.msra.mxu0 0.0
  %231 = vmatprep.subr.mxu0 0.0
  %232 = vmatpush1.msra.mxu0 0.0
  %233 = vmatprep.subr.mxu0 0.0
  %234 = vmatpush1.msra.mxu0 0.0
  %235 = vmatprep.subr.mxu0 0.0
  %236 = vmatpush1.msra.mxu0 0.0
  %237 = vmatprep.subr.mxu0 0.0
  %238 = vmatpush1.msra.mxu0 0.0
  %239 = vmatprep.subr.mxu0 0.0
  %240 = vmatpush1.msra.mxu0 0.0
  %241 = vmatprep.subr.mxu0 0.0
  %242 = vmatpush1.msra.mxu0 0.0
  %243 = vmatprep.subr.mxu0 0.0
  %244 = vmatpush1.msra.mxu0 0.0
  %245 = vmatprep.subr.mxu0 0.0
  %246 = vmatpush1.msra.mxu0 0.0
  %247 = vmatprep.subr.mxu0 0.0
  %248 = vmatpush1.msra.mxu0 0.0
  %249 = vmatprep.subr.mxu0 0.0
  %250 = vmatpush1.msra.mxu0 0.0
  %251 = vmatprep.subr.mxu0 0.0
  %252 = vmatpush1.msra.mxu0 0.0
  %253 = vmatprep.subr.mxu0 0.0
  %254 = vmatpush1.msra.mxu0 0.0
  %255 = vmatprep.subr.mxu0 0.0
  %256 = vmatpush1.msra.mxu0 0.0
  %257 = vmatprep.subr.mxu0 0.0
  %258 = vmatpush1.msra.mxu0 0.0
  %259 = vmatprep.subr.mxu0 0.0
  %260 = vmatpush1.msra.mxu0 0.0
  %261 = vmatprep.subr.mxu0 0.0
  %262 = vmatpush1.msra.mxu0 0.0
  %263 = vmatprep.mubr.f32.mxu0 0.0
  %v264 = vand.u32 %v76, 4294901760
  %265 = vmatmul.mubr.f32.gmra.mrb[0].mxu0 %v264
  %v266 = vpop.f32.mrb[0].mxu0
  %v267 = vadd.f32 %v161, %v266
  %v268 = vpop.f32.mrb[0].mxu0
  %269 = vdwg.mxu0
  %270 = vmatprep.subr.mxu0 0.0
  %v271 = vand.u32 %v57, 4294901760
  %v272 = vsub.f32 %v57, %v271
  %273 = vmatpush1.msra.mxu0 %v272
  %274 = vmatprep.subr.mxu0 0.0
  %v275 = vand.u32 %v58, 4294901760
  %v276 = vsub.f32 %v58, %v275
  %277 = vmatpush1.msra.mxu0 %v276
  %278 = vmatprep.subr.mxu0 0.0
  %v279 = vand.u32 %v59, 4294901760
  %v280 = vsub.f32 %v59, %v279
  %281 = vmatpush1.msra.mxu0 %v280
  %282 = vmatprep.subr.mxu0 0.0
  %v283 = vand.u32 %v60, 4294901760
  %v284 = vsub.f32 %v60, %v283
  %285 = vmatpush1.msra.mxu0 %v284
  %286 = vmatprep.subr.mxu0 0.0
  %v287 = vand.u32 %v61, 4294901760
  %v288 = vsub.f32 %v61, %v287
  %289 = vmatpush1.msra.mxu0 %v288
  %290 = vmatprep.subr.mxu0 0.0
  %v291 = vand.u32 %v62, 4294901760
  %v292 = vsub.f32 %v62, %v291
  %293 = vmatpush1.msra.mxu0 %v292
  %294 = vmatprep.subr.mxu0 0.0
  %v295 = vand.u32 %v80, 4294901760
  %v296 = vsub.f32 %v80, %v295
  %297 = vmatpush1.msra.mxu0 %v296
  %298 = vmatprep.subr.mxu0 0.0
  %299 = vmatpush1.msra.mxu0 0.0
  %300 = vmatprep.subr.mxu0 0.0
  %301 = vmatpush1.msra.mxu0 0.0
  %302 = vmatprep.subr.mxu0 0.0
  %303 = vmatpush1.msra.mxu0 0.0
  %304 = vmatprep.subr.mxu0 0.0
  %305 = vmatpush1.msra.mxu0 0.0
  %306 = vmatprep.subr.mxu0 0.0
  %307 = vmatpush1.msra.mxu0 0.0
  %308 = vmatprep.subr.mxu0 0.0
  %309 = vmatpush1.msra.mxu0 0.0
  %310 = vmatprep.subr.mxu0 0.0
  %311 = vmatpush1.msra.mxu0 0.0
  %312 = vmatprep.subr.mxu0 0.0
  %313 = vmatpush1.msra.mxu0 0.0
  %314 = vmatprep.subr.mxu0 0.0
  %315 = vmatpush1.msra.mxu0 0.0
  %316 = vmatprep.subr.mxu0 0.0
  %317 = vmatpush1.msra.mxu0 0.0
  %318 = vmatprep.subr.mxu0 0.0
  %319 = vmatpush1.msra.mxu0 0.0
  %320 = vmatprep.subr.mxu0 0.0
  %321 = vmatpush1.msra.mxu0 0.0
  %322 = vmatprep.subr.mxu0 0.0
  %323 = vmatpush1.msra.mxu0 0.0
  %324 = vmatprep.subr.mxu0 0.0
  %325 = vmatpush1.msra.mxu0 0.0
  %326 = vmatprep.subr.mxu0 0.0
  %327 = vmatpush1.msra.mxu0 0.0
  %328 = vmatprep.subr.mxu0 0.0
  %329 = vmatpush1.msra.mxu0 0.0
  %330 = vmatprep.subr.mxu0 0.0
  %331 = vmatpush1.msra.mxu0 0.0
  %332 = vmatprep.subr.mxu0 0.0
  %333 = vmatpush1.msra.mxu0 0.0
  %334 = vmatprep.subr.mxu0 0.0
  %335 = vmatpush1.msra.mxu0 0.0
  %336 = vmatprep.subr.mxu0 0.0
  %337 = vmatpush1.msra.mxu0 0.0
  %338 = vmatprep.subr.mxu0 0.0
  %339 = vmatpush1.msra.mxu0 0.0
  %340 = vmatprep.subr.mxu0 0.0
  %341 = vmatpush1.msra.mxu0 0.0
  %342 = vmatprep.subr.mxu0 0.0
  %343 = vmatpush1.msra.mxu0 0.0
  %344 = vmatprep.subr.mxu0 0.0
  %345 = vmatpush1.msra.mxu0 0.0
  %346 = vmatprep.subr.mxu0 0.0
  %347 = vmatpush1.msra.mxu0 0.0
  %348 = vmatprep.mubr.f32.mxu0 0.0
  %v349 = vand.u32 %v76, 4294901760
  %v350 = vsub.f32 %v76, %v349
  %351 = vmatmul.mubr.f32.gmra.mrb[0].mxu0 %v350
  %v352 = vpop.f32.mrb[0].mxu0
  %v353 = vadd.f32 %v267, %v352
  %v354 = vpop.f32.mrb[0].mxu0
  %355 = vdwg.mxu0
  %356 = vmatprep.subr.mxu0 0.0
  %v357 = vand.u32 %v57, 4294901760
  %358 = vmatpush1.msra.mxu0 %v357
  %359 = vmatprep.subr.mxu0 0.0
  %v360 = vand.u32 %v58, 4294901760
  %361 = vmatpush1.msra.mxu0 %v360
  %362 = vmatprep.subr.mxu0 0.0
  %v363 = vand.u32 %v59, 4294901760
  %364 = vmatpush1.msra.mxu0 %v363
  %365 = vmatprep.subr.mxu0 0.0
  %v366 = vand.u32 %v60, 4294901760
  %367 = vmatpush1.msra.mxu0 %v366
  %368 = vmatprep.subr.mxu0 0.0
  %v369 = vand.u32 %v61, 4294901760
  %370 = vmatpush1.msra.mxu0 %v369
  %371 = vmatprep.subr.mxu0 0.0
  %v372 = vand.u32 %v62, 4294901760
  %373 = vmatpush1.msra.mxu0 %v372
  %374 = vmatprep.subr.mxu0 0.0
  %v375 = vand.u32 %v80, 4294901760
  %376 = vmatpush1.msra.mxu0 %v375
  %377 = vmatprep.subr.mxu0 0.0
  %378 = vmatpush1.msra.mxu0 0.0
  %379 = vmatprep.subr.mxu0 0.0
  %380 = vmatpush1.msra.mxu0 0.0
  %381 = vmatprep.subr.mxu0 0.0
  %382 = vmatpush1.msra.mxu0 0.0
  %383 = vmatprep.subr.mxu0 0.0
  %384 = vmatpush1.msra.mxu0 0.0
  %385 = vmatprep.subr.mxu0 0.0
  %386 = vmatpush1.msra.mxu0 0.0
  %387 = vmatprep.subr.mxu0 0.0
  %388 = vmatpush1.msra.mxu0 0.0
  %389 = vmatprep.subr.mxu0 0.0
  %390 = vmatpush1.msra.mxu0 0.0
  %391 = vmatprep.subr.mxu0 0.0
  %392 = vmatpush1.msra.mxu0 0.0
  %393 = vmatprep.subr.mxu0 0.0
  %394 = vmatpush1.msra.mxu0 0.0
  %395 = vmatprep.subr.mxu0 0.0
  %396 = vmatpush1.msra.mxu0 0.0
  %397 = vmatprep.subr.mxu0 0.0
  %398 = vmatpush1.msra.mxu0 0.0
  %399 = vmatprep.subr.mxu0 0.0
  %400 = vmatpush1.msra.mxu0 0.0
  %401 = vmatprep.subr.mxu0 0.0
  %402 = vmatpush1.msra.mxu0 0.0
  %403 = vmatprep.subr.mxu0 0.0
  %404 = vmatpush1.msra.mxu0 0.0
  %405 = vmatprep.subr.mxu0 0.0
  %406 = vmatpush1.msra.mxu0 0.0
  %407 = vmatprep.subr.mxu0 0.0
  %408 = vmatpush1.msra.mxu0 0.0
  %409 = vmatprep.subr.mxu0 0.0
  %410 = vmatpush1.msra.mxu0 0.0
  %411 = vmatprep.subr.mxu0 0.0
  %412 = vmatpush1.msra.mxu0 0.0
  %413 = vmatprep.subr.mxu0 0.0
  %414 = vmatpush1.msra.mxu0 0.0
  %415 = vmatprep.subr.mxu0 0.0
  %416 = vmatpush1.msra.mxu0 0.0
  %417 = vmatprep.subr.mxu0 0.0
  %418 = vmatpush1.msra.mxu0 0.0
  %419 = vmatprep.subr.mxu0 0.0
  %420 = vmatpush1.msra.mxu0 0.0
  %421 = vmatprep.subr.mxu0 0.0
  %422 = vmatpush1.msra.mxu0 0.0
  %423 = vmatprep.subr.mxu0 0.0
  %424 = vmatpush1.msra.mxu0 0.0
  %425 = vmatprep.subr.mxu0 0.0
  %426 = vmatpush1.msra.mxu0 0.0
  %427 = vmatprep.mubr.f32.mxu0 0.0
  %v428 = vand.u32 %v76, 4294901760
  %v429 = vsub.f32 %v76, %v428
  %v430 = vand.u32 %v429, 4294901760
  %431 = vmatmul.mubr.f32.gmra.mrb[0].mxu0 %v430
  %v432 = vpop.f32.mrb[0].mxu0
  %v433 = vadd.f32 %v353, %v432
  %v434 = vpop.f32.mrb[0].mxu0
  %435 = vdwg.mxu0
  %436 = vmatprep.subr.mxu0 0.0
  %v437 = vand.u32 %v57, 4294901760
  %v438 = vsub.f32 %v57, %v437
  %v439 = vand.u32 %v438, 4294901760
  %440 = vmatpush1.msra.mxu0 %v439
  %441 = vmatprep.subr.mxu0 0.0
  %v442 = vand.u32 %v58, 4294901760
  %v443 = vsub.f32 %v58, %v442
  %v444 = vand.u32 %v443, 4294901760
  %445 = vmatpush1.msra.mxu0 %v444
  %446 = vmatprep.subr.mxu0 0.0
  %v447 = vand.u32 %v59, 4294901760
  %v448 = vsub.f32 %v59, %v447
  %v449 = vand.u32 %v448, 4294901760
  %450 = vmatpush1.msra.mxu0 %v449
  %451 = vmatprep.subr.mxu0 0.0
  %v452 = vand.u32 %v60, 4294901760
  %v453 = vsub.f32 %v60, %v452
  %v454 = vand.u32 %v453, 4294901760
  %455 = vmatpush1.msra.mxu0 %v454
  %456 = vmatprep.subr.mxu0 0.0
  %v457 = vand.u32 %v61, 4294901760
  %v458 = vsub.f32 %v61, %v457
  %v459 = vand.u32 %v458, 4294901760
  %460 = vmatpush1.msra.mxu0 %v459
  %461 = vmatprep.subr.mxu0 0.0
  %v462 = vand.u32 %v62, 4294901760
  %v463 = vsub.f32 %v62, %v462
  %v464 = vand.u32 %v463, 4294901760
  %465 = vmatpush1.msra.mxu0 %v464
  %466 = vmatprep.subr.mxu0 0.0
  %v467 = vand.u32 %v80, 4294901760
  %v468 = vsub.f32 %v80, %v467
  %v469 = vand.u32 %v468, 4294901760
  %470 = vmatpush1.msra.mxu0 %v469
  %471 = vmatprep.subr.mxu0 0.0
  %472 = vmatpush1.msra.mxu0 0.0
  %473 = vmatprep.subr.mxu0 0.0
  %474 = vmatpush1.msra.mxu0 0.0
  %475 = vmatprep.subr.mxu0 0.0
  %476 = vmatpush1.msra.mxu0 0.0
  %477 = vmatprep.subr.mxu0 0.0
  %478 = vmatpush1.msra.mxu0 0.0
  %479 = vmatprep.subr.mxu0 0.0
  %480 = vmatpush1.msra.mxu0 0.0
  %481 = vmatprep.subr.mxu0 0.0
  %482 = vmatpush1.msra.mxu0 0.0
  %483 = vmatprep.subr.mxu0 0.0
  %484 = vmatpush1.msra.mxu0 0.0
  %485 = vmatprep.subr.mxu0 0.0
  %486 = vmatpush1.msra.mxu0 0.0
  %487 = vmatprep.subr.mxu0 0.0
  %488 = vmatpush1.msra.mxu0 0.0
  %489 = vmatprep.subr.mxu0 0.0
  %490 = vmatpush1.msra.mxu0 0.0
  %491 = vmatprep.subr.mxu0 0.0
  %492 = vmatpush1.msra.mxu0 0.0
  %493 = vmatprep.subr.mxu0 0.0
  %494 = vmatpush1.msra.mxu0 0.0
  %495 = vmatprep.subr.mxu0 0.0
  %496 = vmatpush1.msra.mxu0 0.0
  %497 = vmatprep.subr.mxu0 0.0
  %498 = vmatpush1.msra.mxu0 0.0
  %499 = vmatprep.subr.mxu0 0.0
  %500 = vmatpush1.msra.mxu0 0.0
  %501 = vmatprep.subr.mxu0 0.0
  %502 = vmatpush1.msra.mxu0 0.0
  %503 = vmatprep.subr.mxu0 0.0
  %504 = vmatpush1.msra.mxu0 0.0
  %505 = vmatprep.subr.mxu0 0.0
  %506 = vmatpush1.msra.mxu0 0.0
  %507 = vmatprep.subr.mxu0 0.0
  %508 = vmatpush1.msra.mxu0 0.0
  %509 = vmatprep.subr.mxu0 0.0
  %510 = vmatpush1.msra.mxu0 0.0
  %511 = vmatprep.subr.mxu0 0.0
  %512 = vmatpush1.msra.mxu0 0.0
  %513 = vmatprep.subr.mxu0 0.0
  %514 = vmatpush1.msra.mxu0 0.0
  %515 = vmatprep.subr.mxu0 0.0
  %516 = vmatpush1.msra.mxu0 0.0
  %517 = vmatprep.subr.mxu0 0.0
  %518 = vmatpush1.msra.mxu0 0.0
  %519 = vmatprep.subr.mxu0 0.0
  %520 = vmatpush1.msra.mxu0 0.0
  %521 = vmatprep.mubr.f32.mxu0 0.0
  %v522 = vand.u32 %v76, 4294901760
  %523 = vmatmul.mubr.f32.gmra.mrb[0].mxu0 %v522
  %v524 = vpop.f32.mrb[0].mxu0
  %v525 = vadd.f32 %v433, %v524
  %v526 = vpop.f32.mrb[0].mxu0
  %527 = vdwg.mxu0
  %528 = vmatprep.subr.mxu0 0.0
  %v529 = vand.u32 %v57, 4294901760
  %530 = vmatpush1.msra.mxu0 %v529
  %531 = vmatprep.subr.mxu0 0.0
  %v532 = vand.u32 %v58, 4294901760
  %533 = vmatpush1.msra.mxu0 %v532
  %534 = vmatprep.subr.mxu0 0.0
  %v535 = vand.u32 %v59, 4294901760
  %536 = vmatpush1.msra.mxu0 %v535
  %537 = vmatprep.subr.mxu0 0.0
  %v538 = vand.u32 %v60, 4294901760
  %539 = vmatpush1.msra.mxu0 %v538
  %540 = vmatprep.subr.mxu0 0.0
  %v541 = vand.u32 %v61, 4294901760
  %542 = vmatpush1.msra.mxu0 %v541
  %543 = vmatprep.subr.mxu0 0.0
  %v544 = vand.u32 %v62, 4294901760
  %545 = vmatpush1.msra.mxu0 %v544
  %546 = vmatprep.subr.mxu0 0.0
  %v547 = vand.u32 %v80, 4294901760
  %548 = vmatpush1.msra.mxu0 %v547
  %549 = vmatprep.subr.mxu0 0.0
  %550 = vmatpush1.msra.mxu0 0.0
  %551 = vmatprep.subr.mxu0 0.0
  %552 = vmatpush1.msra.mxu0 0.0
  %553 = vmatprep.subr.mxu0 0.0
  %554 = vmatpush1.msra.mxu0 0.0
  %555 = vmatprep.subr.mxu0 0.0
  %556 = vmatpush1.msra.mxu0 0.0
  %557 = vmatprep.subr.mxu0 0.0
  %558 = vmatpush1.msra.mxu0 0.0
  %559 = vmatprep.subr.mxu0 0.0
  %560 = vmatpush1.msra.mxu0 0.0
  %561 = vmatprep.subr.mxu0 0.0
  %562 = vmatpush1.msra.mxu0 0.0
  %563 = vmatprep.subr.mxu0 0.0
  %564 = vmatpush1.msra.mxu0 0.0
  %565 = vmatprep.subr.mxu0 0.0
  %566 = vmatpush1.msra.mxu0 0.0
  %567 = vmatprep.subr.mxu0 0.0
  %568 = vmatpush1.msra.mxu0 0.0
  %569 = vmatprep.subr.mxu0 0.0
  %570 = vmatpush1.msra.mxu0 0.0
  %571 = vmatprep.subr.mxu0 0.0
  %572 = vmatpush1.msra.mxu0 0.0
  %573 = vmatprep.subr.mxu0 0.0
  %574 = vmatpush1.msra.mxu0 0.0
  %575 = vmatprep.subr.mxu0 0.0
  %576 = vmatpush1.msra.mxu0 0.0
  %577 = vmatprep.subr.mxu0 0.0
  %578 = vmatpush1.msra.mxu0 0.0
  %579 = vmatprep.subr.mxu0 0.0
  %580 = vmatpush1.msra.mxu0 0.0
  %581 = vmatprep.subr.mxu0 0.0
  %582 = vmatpush1.msra.mxu0 0.0
  %583 = vmatprep.subr.mxu0 0.0
  %584 = vmatpush1.msra.mxu0 0.0
  %585 = vmatprep.subr.mxu0 0.0
  %586 = vmatpush1.msra.mxu0 0.0
  %587 = vmatprep.subr.mxu0 0.0
  %588 = vmatpush1.msra.mxu0 0.0
  %589 = vmatprep.subr.mxu0 0.0
  %590 = vmatpush1.msra.mxu0 0.0
  %591 = vmatprep.subr.mxu0 0.0
  %592 = vmatpush1.msra.mxu0 0.0
  %593 = vmatprep.subr.mxu0 0.0
  %594 = vmatpush1.msra.mxu0 0.0
  %595 = vmatprep.subr.mxu0 0.0
  %596 = vmatpush1.msra.mxu0 0.0
  %597 = vmatprep.subr.mxu0 0.0
  %598 = vmatpush1.msra.mxu0 0.0
  %599 = vmatprep.mubr.f32.mxu0 0.0
  %v600 = vand.u32 %v76, 4294901760
  %601 = vmatmul.mubr.f32.gmra.mrb[0].mxu0 %v600
  %v602 = vpop.f32.mrb[0].mxu0
  %v603 = vadd.f32 %v525, %v602
  %v604 = vpop.f32.mrb[0].mxu0
  %605 = vdwg.mxu0
  %vm606 = vcmask 403456
  %v607 = vsel %vm606, %v72, 0
  %v608 = vand.u32 %v607, 65535
  %v609 = vshrl.u32 %v607, 16
  %v610 = vcvt.s32.f32 %v608
  %v611 = vcvt.s32.f32 %v609
  %612 = vadd.xlane.f32.xlu0 %v610
  %v613 = vpop.xlane.xlu0 %612
  %614 = vadd.xlane.f32.xlu0 %v611
  %v615 = vpop.xlane.xlu0 %614
  %v616 = vcvt.f32.s32 %v613
  %v617 = vcvt.f32.s32 %v615
  %v618 = vshll.u32 %v617, 16
  %v619 = vadd.s32 %v618, %v616
  %v620 = vcvt.s32.f32 %v619
  %v621 = vld [vmem:[%s2] sm:$0x7]
  %v622 = vadd.f32 %v621, %v603
  %vm623 = vcmask 256000
  %624 = vst.msk [vmem:[%s2] sm:$0x7] %vm623, %v622
  %v625 = vld [vmem:[%s3] sm:$0x7]
  %v626 = vadd.f32 %v625, %v620
  %vm627 = vcmask 2048
  %628 = vst.msk [vmem:[%s3] sm:$0x7] %vm627, %v626
  // Predicated region
  $region14: #{tpu_custom_call.1} parent=0 // pred_check
    _
  $region15: #{tpu_custom_call.1} parent=0 // pred_check_branch
    %630 = sbr.rel (0) target = $region17
  $region16: #{tpu_custom_call.1} parent=0 // pred_region
    _
  $region17: #{tpu_custom_call.1} parent=0 // pred_fallthru
    _
  // Predicated region
  $region18: #{tpu_custom_call.1} parent=0 // pred_check
    _
  $region19: #{tpu_custom_call.1} parent=0 // pred_check_branch
    %632 = sbr.rel (0) target = $region21
  $region20: #{tpu_custom_call.1} parent=0 // pred_region
    _
  $region21: #{tpu_custom_call.1} parent=0 // pred_fallthru
    _
  // Predicated region
  $region22: #{tpu_custom_call.1} parent=0 // pred_check
    _
  $region23: #{tpu_custom_call.1} parent=0 // pred_check_branch
    %634 = sbr.rel (0) target = $region25
  $region24: #{tpu_custom_call.1} parent=0 // pred_region
    _
  $region25: #{tpu_custom_call.1} parent=0 // pred_fallthru
    _
  // Predicated region
  $region26: #{tpu_custom_call.1} parent=0 // pred_check
    _
  $region27: #{tpu_custom_call.1} parent=0 // pred_check_branch
    %636 = sbr.rel (0) target = $region29
  $region28: #{tpu_custom_call.1} parent=0 // pred_region
    _
  $region29: #{tpu_custom_call.1} parent=0 // pred_fallthru
    _

</llo_original>
